<compile_context>
chip_gen: v5e
topology: v5e:2x2
jax: 0.10.0
libtpu: 0.0.40
codegen_flags: <defaults>
</compile_context>

<pallas_src>
import functools

import jax
import jax.numpy as jnp
from jax import lax
from jax.experimental import pallas as pl
from jax.experimental.pallas import tpu as pltpu


def _basic_block_kernel(x_ref, w1_ref, w2_ref, b1_ref, b2_ref, out_ref,
                        *, Nb, L, use_roll):
    # x_ref  : (Nb, Cin, L)   f32/bf16  native NCL block (full L extent)
    # w1_ref : (Cmid, 3*Cin)  bf16      conv1 weights, taps flat, BN1 scale folded
    # w2_ref : (Cout, 3*Cmid) bf16      conv2 weights, taps flat, BN2 scale folded
    # b1_ref : (Cmid, 1)      f32       BN1 shift
    # b2_ref : (Cout, 1)      f32       BN2 shift
    # out_ref: (Nb, Cout, L)  same dtype as x
    Cin = x_ref.shape[1]
    Cmid = w1_ref.shape[0]

    w1 = w1_ref[...]
    w2 = w2_ref[...]
    b1 = b1_ref[...]
    b2 = b2_ref[...]

    # ---- hoisted halo helpers (built once per grid step) -------------------
    if use_roll:
        col = lax.broadcasted_iota(jnp.int32, (1, L), 1)
        first_col = col == 0
        last_col = col == (L - 1)
        zero = jnp.zeros((), jnp.bfloat16)

        def tap_stack(v):  # v: (C, L) bf16 -> (3*C, L) bf16 rows [x_{l-1}|x_l|x_{l+1}]
            prev = jnp.where(first_col, zero, pltpu.roll(v, 1, 1))
            nxt = jnp.where(last_col, zero, pltpu.roll(v, -1, 1))
            return jnp.concatenate([prev, v, nxt], axis=0)
    else:
        zcols = {Cin: jnp.zeros((Cin, 1), jnp.bfloat16)}
        if Cmid not in zcols:
            zcols[Cmid] = jnp.zeros((Cmid, 1), jnp.bfloat16)

        def tap_stack(v):  # v: (C, L) bf16 -> (3*C, L) bf16
            z = zcols[v.shape[0]]
            prev = jnp.concatenate([z, v[:, : L - 1]], axis=1)
            nxt = jnp.concatenate([v[:, 1:], z], axis=1)
            return jnp.concatenate([prev, v, nxt], axis=0)

    # ---- per-batch-element body --------------------------------------------
    def body(n, carry):
        xn = x_ref[n]                                      # (Cin, L) io dtype
        x_bf = xn.astype(jnp.bfloat16)
        x_f32 = xn.astype(jnp.float32)                     # residual in f32

        # conv1 (BN1 scale folded into w1) -> + BN1 shift -> ReLU
        h = jnp.dot(w1, tap_stack(x_bf),
                    preferred_element_type=jnp.float32)    # (Cmid, L) f32
        h = jnp.maximum(h + b1, 0.0)

        # conv2 (BN2 scale folded into w2) -> + BN2 shift -> + identity -> ReLU
        o = jnp.dot(w2, tap_stack(h.astype(jnp.bfloat16)),
                    preferred_element_type=jnp.float32)    # (Cout, L) f32
        o = jnp.maximum(o + b2 + x_f32, 0.0)

        out_ref[n] = o.astype(out_ref.dtype)
        return carry

    lax.fori_loop(0, Nb, body, None, unroll=min(Nb, 8))


def basic_block_pallas(x_ncl, w1, w2, scale1, shift1, scale2, shift2,
                       *, out_dtype=None):
    """BasicBlock forward (stride=1, downsample=None, inference-mode BN).

    x_ncl : (N, C, L) float32 or bfloat16, PyTorch Conv1d layout.
    w1, w2: (Cout, Cin, 3) PyTorch Conv1d weights (stride=1, pad=1, no bias).
    scale*/shift*: per-channel folded BatchNorm1d (inference) scale / shift.
    Returns (N, C, L) in x's dtype (or `out_dtype` if given).
    """
    N, C, L = x_ncl.shape
    Cmid, Cin1, K1 = w1.shape
    Cout, Cin2, K2 = w2.shape
    assert K1 == 3 and K2 == 3 and Cin1 == C and Cin2 == Cmid
    assert Cout == C, "identity residual requires Cout == Cin (downsample=None)"

    io_dtype = x_ncl.dtype
    out_dtype = io_dtype if out_dtype is None else out_dtype

    # ---- VMEM-aware batch-block (Nb) selection ------------------------------
    phys_vmem = 64 * 1024 * 1024               # conservative default (v7x per-core)
    try:
        phys_vmem = int(pltpu.get_tpu_info().vmem_capacity_bytes)
    except Exception:
        pass
    budget = phys_vmem // 2                    # leave headroom for compiler scratch
    vmem_limit = int(min(phys_vmem - (8 << 20), budget + (16 << 20)))

    in_b = jnp.dtype(io_dtype).itemsize
    ou_b = jnp.dtype(out_dtype).itemsize
    # per element: double-buffered in/out pipeline blocks + bf16 tap stacks
    # + f32 partials/residual live inside the body
    per_n = (2 * (C * L * in_b + Cout * L * ou_b)
             + (3 * C + 3 * Cmid) * L * 2
             + (Cmid + 2 * Cout) * L * 4)
    fixed = 2 * ((Cmid * 3 * C + Cout * 3 * Cmid) * 2     # bf16 weights (dbl-buffered)
                 + (Cmid + Cout) * 128 * 4)                # f32 shifts (lane-padded)
    Nb = int(max(1, min(N, (budget - fixed) // max(per_n, 1))))
    if N >= 2:
        # keep grid >= 2 so both v7x TensorCores get work and I/O pipelines
        Nb = min(Nb, pl.cdiv(N, 2))

    grid_n = pl.cdiv(N, Nb)
    N_pad = grid_n * Nb
    x_in = x_ncl if N_pad == N else jnp.pad(x_ncl, ((0, N_pad - N), (0, 0), (0, 0)))

    # Fold BN scale into conv weights; flatten taps so each conv is ONE matmul:
    # flat index [o, k*Cin + i]  <->  rows [prev | center | next] of the stack.
    def fold_flat(w, scale):
        o, i, k = w.shape
        wf = jnp.transpose(w.astype(jnp.float32), (0, 2, 1)).reshape(o, k * i)
        return (wf * scale.astype(jnp.float32)[:, None]).astype(jnp.bfloat16)

    w1f = fold_flat(w1, scale1)                      # (Cmid, 3*C)    bf16
    w2f = fold_flat(w2, scale2)                      # (Cout, 3*Cmid) bf16
    b1 = shift1.reshape(Cmid, 1).astype(jnp.float32)
    b2 = shift2.reshape(Cout, 1).astype(jnp.float32)

    use_roll = (L % 128 == 0)   # roll-based halo only when lane-aligned
    kernel = functools.partial(_basic_block_kernel, Nb=Nb, L=L, use_roll=use_roll)

    out = pl.pallas_call(
        kernel,
        out_shape=jax.ShapeDtypeStruct((N_pad, Cout, L), out_dtype),
        grid_spec=pltpu.PrefetchScalarGridSpec(
            num_scalar_prefetch=0,
            grid=(grid_n,),
            in_specs=[
                pl.BlockSpec((Nb, C, L), lambda b: (b, 0, 0)),        # x (native NCL)
                pl.BlockSpec((Cmid, 3 * C), lambda b: (0, 0)),        # w1 (folded, flat)
                pl.BlockSpec((Cout, 3 * Cmid), lambda b: (0, 0)),     # w2 (folded, flat)
                pl.BlockSpec((Cmid, 1), lambda b: (0, 0)),            # bn1 shift
                pl.BlockSpec((Cout, 1), lambda b: (0, 0)),            # bn2 shift
            ],
            out_specs=pl.BlockSpec((Nb, Cout, L), lambda b: (b, 0, 0)),
        ),
        compiler_params=pltpu.CompilerParams(
            dimension_semantics=("parallel",),       # batch blocks are independent
            vmem_limit_bytes=vmem_limit),
    )(x_in, w1f, w2f, b1, b2)

    return out if N_pad == N else out[:N]


def basic_block_reference(x_ncl, w1, w2, scale1, shift1, scale2, shift2):
    """Pure-JAX f32 reference using lax.conv (independent of the kernel path)."""

    def conv1d(v, w):  # w in PyTorch (O, I, K) layout
        return lax.conv_general_dilated(
            v, w, window_strides=(1,), padding=((1, 1),),
            dimension_numbers=('NCH', 'OIH', 'NCH'))

    h = conv1d(x_ncl, w1)
    h = h * scale1[None, :, None] + shift1[None, :, None]
    h = jnp.maximum(h, 0.0)
    o = conv1d(h, w2)
    o = o * scale2[None, :, None] + shift2[None, :, None]
    o = o + x_ncl
    return jnp.maximum(o, 0.0)


if __name__ == "__main__":
    key = jax.random.PRNGKey(0)
    (k_x, k_w1, k_w2, k_g1, k_b1, k_m1, k_v1, k_g2, k_b2, k_m2, k_v2) = \
        jax.random.split(key, 11)

    N, C, L = 2, 4, 16          # inplanes = planes = 4, stride = 1, downsample = None
    eps = 1e-5

    x = jax.random.normal(k_x, (N, C, L), jnp.float32)

    # conv weights in PyTorch Conv1d layout (Cout, Cin, K=3)
    w1 = jax.random.normal(k_w1, (C, C, 3), jnp.float32) * 0.2
    w2 = jax.random.normal(k_w2, (C, C, 3), jnp.float32) * 0.2

    # BatchNorm1d params (inference mode), folded into per-channel scale/shift
    gamma1 = 1.0 + 0.1 * jax.random.normal(k_g1, (C,), jnp.float32)
    beta1 = 0.1 * jax.random.normal(k_b1, (C,), jnp.float32)
    rmean1 = 0.1 * jax.random.normal(k_m1, (C,), jnp.float32)
    rvar1 = 1.0 + 0.1 * jax.random.uniform(k_v1, (C,), jnp.float32)
    gamma2 = 1.0 + 0.1 * jax.random.normal(k_g2, (C,), jnp.float32)
    beta2 = 0.1 * jax.random.normal(k_b2, (C,), jnp.float32)
    rmean2 = 0.1 * jax.random.normal(k_m2, (C,), jnp.float32)
    rvar2 = 1.0 + 0.1 * jax.random.uniform(k_v2, (C,), jnp.float32)

    scale1 = gamma1 / jnp.sqrt(rvar1 + eps)
    shift1 = beta1 - rmean1 * scale1
    scale2 = gamma2 / jnp.sqrt(rvar2 + eps)
    shift2 = beta2 - rmean2 * scale2

    # --- f32 HBM I/O path (bf16 MXU matmuls, f32 accumulation) ---------------
    out = basic_block_pallas(x, w1, w2, scale1, shift1, scale2, shift2)
    out = jax.block_until_ready(out)
    ref = basic_block_reference(x, w1, w2, scale1, shift1, scale2, shift2)
    ref = jax.block_until_ready(ref)
    assert out.shape == (N, C, L)
    err = float(jnp.max(jnp.abs(out - ref)))
    assert jnp.allclose(out, ref, atol=5e-2, rtol=5e-2), f"f32 path max abs err {err}"

    # --- bf16 HBM I/O path (halved memory traffic) ---------------------------
    x_bf = x.astype(jnp.bfloat16)
    out_bf = basic_block_pallas(x_bf, w1, w2, scale1, shift1, scale2, shift2)
    out_bf = jax.block_until_ready(out_bf)
    ref_bf = basic_block_reference(x_bf.astype(jnp.float32), w1, w2,
                                   scale1, shift1, scale2, shift2)
    err_bf = float(jnp.max(jnp.abs(out_bf.astype(jnp.float32) - ref_bf)))
    assert out_bf.dtype == jnp.bfloat16 and out_bf.shape == (N, C, L)
    assert jnp.allclose(out_bf.astype(jnp.float32), ref_bf,
                        atol=1e-1, rtol=1e-1), f"bf16 path max abs err {err_bf}"

    print("KERNEL_OK")
</pallas_src>

<mosaic_0001>
module attributes {stable_mosaic.version = 11 : i64} {
  func.func @_basic_block_kernel(%arg0: i32, %arg1: memref<1x4x16xf32, #tpu.memory_space<vmem>>, %arg2: memref<4x12xbf16, #tpu.memory_space<vmem>>, %arg3: memref<4x12xbf16, #tpu.memory_space<vmem>>, %arg4: memref<4x1xf32, #tpu.memory_space<vmem>>, %arg5: memref<4x1xf32, #tpu.memory_space<vmem>>, %arg6: memref<1x4x16xf32, #tpu.memory_space<vmem>>) attributes {dimension_semantics = [#tpu.dimension_semantics<parallel>], iteration_bounds = array<i64: 2>, scalar_prefetch = 0 : i64, scratch_operands = 0 : i64, tpu.core_type = #tpu.core_type<tc>, window_params = [{transform_indices = @transform_0, window_bounds = array<i64: 1, 4, 16>}, {pipeline_mode = #tpu.pipeline_mode<synchronous>, transform_indices = @transform_1, window_bounds = array<i64: 4, 12>}, {pipeline_mode = #tpu.pipeline_mode<synchronous>, transform_indices = @transform_2, window_bounds = array<i64: 4, 12>}, {pipeline_mode = #tpu.pipeline_mode<synchronous>, transform_indices = @transform_3, window_bounds = array<i64: 4, 1>}, {pipeline_mode = #tpu.pipeline_mode<synchronous>, transform_indices = @transform_4, window_bounds = array<i64: 4, 1>}, {transform_indices = @transform_5, window_bounds = array<i64: 1, 4, 16>}]} {
    %c0 = arith.constant 0 : index
    %c0_0 = arith.constant 0 : index
    %0 = vector.load %arg2[%c0, %c0_0] : memref<4x12xbf16, #tpu.memory_space<vmem>>, vector<4x12xbf16>
    %c0_1 = arith.constant 0 : index
    %c0_2 = arith.constant 0 : index
    %1 = vector.load %arg3[%c0_1, %c0_2] : memref<4x12xbf16, #tpu.memory_space<vmem>>, vector<4x12xbf16>
    %c0_3 = arith.constant 0 : index
    %c0_4 = arith.constant 0 : index
    %2 = vector.load %arg4[%c0_3, %c0_4] : memref<4x1xf32, #tpu.memory_space<vmem>>, vector<4x1xf32>
    %c0_5 = arith.constant 0 : index
    %c0_6 = arith.constant 0 : index
    %3 = vector.load %arg5[%c0_5, %c0_6] : memref<4x1xf32, #tpu.memory_space<vmem>>, vector<4x1xf32>
    %cst = arith.constant 0.000000e+00 : bf16
    %4 = vector.broadcast %cst : bf16 to vector<4x1xbf16>
    %c0_i32 = arith.constant 0 : i32
    %5 = arith.index_cast %c0_i32 : i32 to index
    %c0_7 = arith.constant 0 : index
    %c0_8 = arith.constant 0 : index
    %6 = vector.load %arg1[%5, %c0_7, %c0_8] : memref<1x4x16xf32, #tpu.memory_space<vmem>>, vector<1x4x16xf32>
    %7 = vector.shape_cast %6 : vector<1x4x16xf32> to vector<4x16xf32>
    %8 = arith.truncf %7 : vector<4x16xf32> to vector<4x16xbf16>
    %9 = vector.extract_strided_slice %8 {offsets = [0, 0], sizes = [4, 15], strides = [1, 1]} : vector<4x16xbf16> to vector<4x15xbf16>
    %10 = tpu.concatenate %4, %9 in 1 : vector<4x1xbf16>, vector<4x15xbf16> -> vector<4x16xbf16>
    %11 = vector.extract_strided_slice %8 {offsets = [0, 1], sizes = [4, 15], strides = [1, 1]} : vector<4x16xbf16> to vector<4x15xbf16>
    %12 = tpu.concatenate %11, %4 in 1 : vector<4x15xbf16>, vector<4x1xbf16> -> vector<4x16xbf16>
    %13 = tpu.concatenate %10, %8, %12 in 0 : vector<4x16xbf16>, vector<4x16xbf16>, vector<4x16xbf16> -> vector<12x16xbf16>
    %cst_9 = arith.constant dense<0.000000e+00> : vector<4x16xf32>
    %14 = tpu.matmul %0, %13, %cst_9 {dimension_numbers = #tpu.dot_dimension_numbers<[1], [0], [0], [1], [0, 0, 1, 1], [], []>} : vector<4x12xbf16>, vector<12x16xbf16>, vector<4x16xf32> -> vector<4x16xf32>
    %15 = vector.broadcast %2 : vector<4x1xf32> to vector<4x16xf32>
    %16 = arith.addf %14, %15 : vector<4x16xf32>
    %cst_10 = arith.constant 0.000000e+00 : f32
    %17 = vector.broadcast %cst_10 : f32 to vector<4x16xf32>
    %18 = arith.maximumf %16, %17 : vector<4x16xf32>
    %19 = arith.truncf %18 : vector<4x16xf32> to vector<4x16xbf16>
    %20 = vector.extract_strided_slice %19 {offsets = [0, 0], sizes = [4, 15], strides = [1, 1]} : vector<4x16xbf16> to vector<4x15xbf16>
    %21 = tpu.concatenate %4, %20 in 1 : vector<4x1xbf16>, vector<4x15xbf16> -> vector<4x16xbf16>
    %22 = vector.extract_strided_slice %19 {offsets = [0, 1], sizes = [4, 15], strides = [1, 1]} : vector<4x16xbf16> to vector<4x15xbf16>
    %23 = tpu.concatenate %22, %4 in 1 : vector<4x15xbf16>, vector<4x1xbf16> -> vector<4x16xbf16>
    %24 = tpu.concatenate %21, %19, %23 in 0 : vector<4x16xbf16>, vector<4x16xbf16>, vector<4x16xbf16> -> vector<12x16xbf16>
    %cst_11 = arith.constant dense<0.000000e+00> : vector<4x16xf32>
    %25 = tpu.matmul %1, %24, %cst_11 {dimension_numbers = #tpu.dot_dimension_numbers<[1], [0], [0], [1], [0, 0, 1, 1], [], []>} : vector<4x12xbf16>, vector<12x16xbf16>, vector<4x16xf32> -> vector<4x16xf32>
    %26 = vector.broadcast %3 : vector<4x1xf32> to vector<4x16xf32>
    %27 = arith.addf %25, %26 : vector<4x16xf32>
    %28 = arith.addf %27, %7 : vector<4x16xf32>
    %cst_12 = arith.constant 0.000000e+00 : f32
    %29 = vector.broadcast %cst_12 : f32 to vector<4x16xf32>
    %30 = arith.maximumf %28, %29 : vector<4x16xf32>
    %31 = arith.index_cast %c0_i32 : i32 to index
    %c0_13 = arith.constant 0 : index
    %c0_14 = arith.constant 0 : index
    %32 = vector.load %arg6[%31, %c0_13, %c0_14] : memref<1x4x16xf32, #tpu.memory_space<vmem>>, vector<1x4x16xf32>
    %33 = vector.shape_cast %32 : vector<1x4x16xf32> to vector<4x16xf32>
    %34 = vector.shape_cast %30 : vector<4x16xf32> to vector<1x4x16xf32>
    tpu.vector_store %arg6[%31, %c0_13, %c0_14], %34 {strides = array<i32>} : memref<1x4x16xf32, #tpu.memory_space<vmem>>, vector<1x4x16xf32>,
    %c1_i32 = arith.constant 1 : i32
    return
  }
  func.func @transform_0(%arg0: i32) -> (i32, i32, i32) {
    %c0_i32 = arith.constant 0 : i32
    %c0_i32_0 = arith.constant 0 : i32
    %c0_i32_1 = arith.constant 0 : i32
    return %arg0, %c0_i32, %c0_i32_0 : i32, i32, i32
  }
  func.func @transform_1(%arg0: i32) -> (i32, i32) {
    %c0_i32 = arith.constant 0 : i32
    %c0_i32_0 = arith.constant 0 : i32
    %c0_i32_1 = arith.constant 0 : i32
    return %c0_i32, %c0_i32_0 : i32, i32
  }
  func.func @transform_2(%arg0: i32) -> (i32, i32) {
    %c0_i32 = arith.constant 0 : i32
    %c0_i32_0 = arith.constant 0 : i32
    %c0_i32_1 = arith.constant 0 : i32
    return %c0_i32, %c0_i32_0 : i32, i32
  }
  func.func @transform_3(%arg0: i32) -> (i32, i32) {
    %c0_i32 = arith.constant 0 : i32
    %c0_i32_0 = arith.constant 0 : i32
    %c0_i32_1 = arith.constant 0 : i32
    return %c0_i32, %c0_i32_0 : i32, i32
  }
  func.func @transform_4(%arg0: i32) -> (i32, i32) {
    %c0_i32 = arith.constant 0 : i32
    %c0_i32_0 = arith.constant 0 : i32
    %c0_i32_1 = arith.constant 0 : i32
    return %c0_i32, %c0_i32_0 : i32, i32
  }
  func.func @transform_5(%arg0: i32) -> (i32, i32, i32) {
    %c0_i32 = arith.constant 0 : i32
    %c0_i32_0 = arith.constant 0 : i32
    %c0_i32_1 = arith.constant 0 : i32
    return %arg0, %c0_i32, %c0_i32_0 : i32, i32, i32
  }
}

</mosaic_0001>

<llo_original>
// kernel: tpu_custom_call.1
$region0: #{tpu_custom_call.1}
  #allocation0 [shape = 'u32[]', space=smem, size = 0x4, offset = 0x4, fixed_abs, tag = 'smem constant byte address 0x4 - core index']
  #allocation1 [shape = 'u32[72,128]{1,0:T(1,128)}', space=vmem, size = 0x9000, scoped, tag = 'internal scratch']
  %s0 = inlined_call_operand.vmem [shape: f32[2,4,16], index: 0, kind: input, shape index: {}]
  %s1 = inlined_call_operand.hbm [shape: bf16[4,12], index: 1, kind: input, shape index: {}]
  %s2 = inlined_call_operand.hbm [shape: bf16[4,12], index: 2, kind: input, shape index: {}]
  %s3 = inlined_call_operand.vmem [shape: f32[4,1], index: 3, kind: input, shape index: {}]
  %s4 = inlined_call_operand.vmem [shape: f32[4,1], index: 4, kind: input, shape index: {}]
  %s5 = inlined_call_operand.hbm [shape: f32[2,4,16], index: 5, kind: output, shape index: {}]
  %s6 = sld [smem:[#allocation0]]
  $region61: #{tpu_custom_call.1} parent=0
    _
  %s8 = ssub.s32 1, %s6
  %s9 = scalar_select 0, %s8, %s6
  $region1: #{tpu_custom_call.1} parent=0
    #allocation2 [shape = 'u8[1024]{0}', space=vmem, size = 0x400, scoped, tag = 'input window, operand 1, single buffered']
    #allocation3 [shape = 's32[2]{0}', space=sflag, size = 0x8, scoped, tag = 'scoped memory for tpu_custom_call.1']
    #allocation4 [shape = 's32[2]{0}', space=sflag, size = 0x8, scoped, tag = 'scoped memory for tpu_custom_call.1']
    #allocation5 [shape = 'u8[1024]{0}', space=vmem, size = 0x400, scoped, tag = 'input window, operand 2, single buffered']
    #allocation6 [shape = 's32[1]{0}', space=sflag, size = 0x4, scoped, tag = 'scoped memory for tpu_custom_call.1']
    #allocation7 [shape = 'u8[4096]{0}', space=vmem, size = 0x1000, scoped, tag = 'output window, operand 0']
    %10 = vsyncpa [#allocation3], 0
    %11 = vsyncpa [#allocation6], 0
    %12 = vsyncpa [#allocation4], 0
    %s13 = scalar_lea.sflag [#allocation4], 1
    %14 = vsyncpa %s13, 0
    loop: start=0, step=1, limit=4
    $region2: #{tpu_custom_call.1} parent=1 // loop_pre_header
      _
    $region3: #{tpu_custom_call.1} parent=1 // loop_header
      %s16 = sphi 0, %s20
      %p17 = scmp.ge.s32.totalorder %s16, 4
      %s26 = sphi 0, %s28
      %s29 = sphi 0, %s26
      %s30 = sphi 0, %s29
      %s46 = sphi 0, %s30
      %s50 = sphi 0, %s50
      %s52 = sphi 0, %s50
      %s53 = sphi 0, %s52
      %s67 = sphi 0, %s53
      %s71 = sphi 0, %s71
      %s73 = sphi 0, %s71
      %s74 = sphi 0, %s73
      %s88 = sphi 0, %s74
      %s92 = sphi 0, %s92
      %s94 = sphi 0, %s92
      %s95 = sphi 0, %s94
      %s109 = sphi 0, %s95
      %s113 = sphi 0, %s113
      %s115 = sphi 0, %s113
      %s116 = sphi 0, %s115
      %s130 = sphi 0, %s116
      %s136 = sphi 0, %s138
      %s139 = sphi 0, %s136
      %s140 = sphi 0, %s139
      %s156 = sphi 0, %s140
    $region4: #{tpu_custom_call.1} parent=1 // loop_header_branch
      %19 = sbr.rel (%p17) target = $region8
    $region5: #{tpu_custom_call.1} parent=1 // loop_body
      %s21 = ssub.s32 %s16, 1
      %s22 = ssub.s32 %s16, 2
      %s23 = sadd.s32 %s16, 1
      %s24 = ssub.s32 %s16, %s23
      %p25 = scmp.eq.s32.totalorder %s24, 0
      %s27 = sadd.s32 %s26, 1
      %s28 = scalar_select %p25, %s26, %s27
      %p31 = pneg %p25
      %p32 = scmp.eq.s32.totalorder %s16, 1
      %p33 = por %p31, %p32
      %p34 = scmp.ne.s32.totalorder %s26, %s29
      %p35 = scmp.eq.s32.totalorder %s16, 0
      %p36 = por %p34, %p35
      %p37 = scmp.ne.s32.totalorder %s26, %s29
      %p38 = scmp.eq.s32.totalorder %s21, 1
      %p39 = por %p37, %p38
      %p40 = scmp.ne.s32.totalorder %s29, %s30
      %p41 = scmp.eq.s32.totalorder %s21, 0
      %p42 = por %p40, %p41
      %p43 = scmp.ne.s32.totalorder %s29, %s30
      %p44 = scmp.eq.s32.totalorder %s22, 1
      %p45 = por %p43, %p44
      %p47 = scmp.ne.s32.totalorder %s30, %s46
      %p48 = scmp.eq.s32.totalorder %s22, 0
      %p49 = por %p47, %p48
      %s51 = sadd.s32 %s50, 1
      %p54 = scmp.eq.s32.totalorder %s16, 1
      %p55 = scmp.ne.s32.totalorder %s50, %s52
      %p56 = scmp.eq.s32.totalorder %s16, 0
      %p57 = por %p55, %p56
      %p58 = scmp.ne.s32.totalorder %s50, %s52
      %p59 = scmp.eq.s32.totalorder %s21, 1
      %p60 = por %p58, %p59
      %p61 = scmp.ne.s32.totalorder %s52, %s53
      %p62 = scmp.eq.s32.totalorder %s21, 0
      %p63 = por %p61, %p62
      %p64 = scmp.ne.s32.totalorder %s52, %s53
      %p65 = scmp.eq.s32.totalorder %s22, 1
      %p66 = por %p64, %p65
      %p68 = scmp.ne.s32.totalorder %s53, %s67
      %p69 = scmp.eq.s32.totalorder %s22, 0
      %p70 = por %p68, %p69
      %s72 = sadd.s32 %s71, 1
      %p75 = scmp.eq.s32.totalorder %s16, 1
      %p76 = scmp.ne.s32.totalorder %s71, %s73
      %p77 = scmp.eq.s32.totalorder %s16, 0
      %p78 = por %p76, %p77
      %p79 = scmp.ne.s32.totalorder %s71, %s73
      %p80 = scmp.eq.s32.totalorder %s21, 1
      %p81 = por %p79, %p80
      %p82 = scmp.ne.s32.totalorder %s73, %s74
      %p83 = scmp.eq.s32.totalorder %s21, 0
      %p84 = por %p82, %p83
      %p85 = scmp.ne.s32.totalorder %s73, %s74
      %p86 = scmp.eq.s32.totalorder %s22, 1
      %p87 = por %p85, %p86
      %p89 = scmp.ne.s32.totalorder %s74, %s88
      %p90 = scmp.eq.s32.totalorder %s22, 0
      %p91 = por %p89, %p90
      %s93 = sadd.s32 %s92, 1
      %p96 = scmp.eq.s32.totalorder %s16, 1
      %p97 = scmp.ne.s32.totalorder %s92, %s94
      %p98 = scmp.eq.s32.totalorder %s16, 0
      %p99 = por %p97, %p98
      %p100 = scmp.ne.s32.totalorder %s92, %s94
      %p101 = scmp.eq.s32.totalorder %s21, 1
      %p102 = por %p100, %p101
      %p103 = scmp.ne.s32.totalorder %s94, %s95
      %p104 = scmp.eq.s32.totalorder %s21, 0
      %p105 = por %p103, %p104
      %p106 = scmp.ne.s32.totalorder %s94, %s95
      %p107 = scmp.eq.s32.totalorder %s22, 1
      %p108 = por %p106, %p107
      %p110 = scmp.ne.s32.totalorder %s95, %s109
      %p111 = scmp.eq.s32.totalorder %s22, 0
      %p112 = por %p110, %p111
      %s114 = sadd.s32 %s113, 1
      %p117 = scmp.eq.s32.totalorder %s16, 1
      %p118 = scmp.ne.s32.totalorder %s113, %s115
      %p119 = scmp.eq.s32.totalorder %s16, 0
      %p120 = por %p118, %p119
      %p121 = scmp.ne.s32.totalorder %s113, %s115
      %p122 = scmp.eq.s32.totalorder %s21, 1
      %p123 = por %p121, %p122
      %p124 = scmp.ne.s32.totalorder %s115, %s116
      %p125 = scmp.eq.s32.totalorder %s21, 0
      %p126 = por %p124, %p125
      %p127 = scmp.ne.s32.totalorder %s115, %s116
      %p128 = scmp.eq.s32.totalorder %s22, 1
      %p129 = por %p127, %p128
      %p131 = scmp.ne.s32.totalorder %s116, %s130
      %p132 = scmp.eq.s32.totalorder %s22, 0
      %p133 = por %p131, %p132
      %s134 = ssub.s32 %s16, %s23
      %p135 = scmp.eq.s32.totalorder %s134, 0
      %s137 = sadd.s32 %s136, 1
      %s138 = scalar_select %p135, %s136, %s137
      %p141 = pneg %p135
      %p142 = scmp.eq.s32.totalorder %s16, 1
      %p143 = por %p141, %p142
      %p144 = scmp.ne.s32.totalorder %s136, %s139
      %p145 = scmp.eq.s32.totalorder %s16, 0
      %p146 = por %p144, %p145
      %p147 = scmp.ne.s32.totalorder %s136, %s139
      %p148 = scmp.eq.s32.totalorder %s21, 1
      %p149 = por %p147, %p148
      %p150 = scmp.ne.s32.totalorder %s139, %s140
      %p151 = scmp.eq.s32.totalorder %s21, 0
      %p152 = por %p150, %p151
      %p153 = scmp.ne.s32.totalorder %s139, %s140
      %p154 = scmp.eq.s32.totalorder %s22, 1
      %p155 = por %p153, %p154
      %p157 = scmp.ne.s32.totalorder %s140, %s156
      %p158 = scmp.eq.s32.totalorder %s22, 0
      %p159 = por %p157, %p158
      %p160 = scmp.le.s32.totalorder 1, %s16
      %p161 = scmp.lt.s32.totalorder %s16, 3
      %p162 = pnand %p160, %p161
      %p163 = pneg %p162
      // Predicated region
      $region9: #{tpu_custom_call.1} parent=5 // pred_check
        _
      $region10: #{tpu_custom_call.1} parent=5 // pred_check_branch
        %165 = sbr.rel (%p162) target = $region12
      $region11: #{tpu_custom_call.1} parent=5 // pred_region
        %s166 = ssub.s32 %s16, 1
        // Predicated region
        $region13: #{tpu_custom_call.1} parent=11 // pred_check
          %p167 = pneg %p63
        $region14: #{tpu_custom_call.1} parent=11 // pred_check_branch
          %169 = sbr.rel (%p167) target = $region16
        $region15: #{tpu_custom_call.1} parent=11 // pred_region
          %171 = vsyncadd [#allocation3], 0
          %s173 = sshll.u32 %s1, 4
          %s174 = int_to_ptr.hbm [resolvable:$true] %s173
          %s175 = sshll.u32 [#allocation2], 4
          %s176 = int_to_ptr.vmem [resolvable:$true] %s175
          %178 = dma.hbm_to_vmem [thread:$0]  %s174, 32, %s176, [#allocation3]
        $region16: #{tpu_custom_call.1} parent=11 // pred_fallthru
          _
        // Predicated region
        $region17: #{tpu_custom_call.1} parent=11 // pred_check
          %p179 = pneg %p84
        $region18: #{tpu_custom_call.1} parent=11 // pred_check_branch
          %181 = sbr.rel (%p179) target = $region20
        $region19: #{tpu_custom_call.1} parent=11 // pred_region
          %183 = vsyncadd [#allocation6], 0
          %s185 = sshll.u32 %s2, 4
          %s186 = int_to_ptr.hbm [resolvable:$true] %s185
          %s187 = sshll.u32 [#allocation5], 4
          %s188 = int_to_ptr.vmem [resolvable:$true] %s187
          %190 = dma.hbm_to_vmem [thread:$0]  %s186, 32, %s188, [#allocation6]
        $region20: #{tpu_custom_call.1} parent=11 // pred_fallthru
          _
        // Predicated region
        $region21: #{tpu_custom_call.1} parent=11 // pred_check
          %p191 = pneg %p105
        $region22: #{tpu_custom_call.1} parent=11 // pred_check_branch
          %193 = sbr.rel (%p191) target = $region24
        $region23: #{tpu_custom_call.1} parent=11 // pred_region
          _
        $region24: #{tpu_custom_call.1} parent=11 // pred_fallthru
          _
        // Predicated region
        $region25: #{tpu_custom_call.1} parent=11 // pred_check
          %p194 = pneg %p126
        $region26: #{tpu_custom_call.1} parent=11 // pred_check_branch
          %196 = sbr.rel (%p194) target = $region28
        $region27: #{tpu_custom_call.1} parent=11 // pred_region
          _
        $region28: #{tpu_custom_call.1} parent=11 // pred_fallthru
          _
      $region12: #{tpu_custom_call.1} parent=5 // pred_fallthru
        _
      %p197 = scmp.lt.s32.totalorder %s16, 2
      // Predicated region
      $region29: #{tpu_custom_call.1} parent=5 // pred_check
        %p198 = pneg %p197
      $region30: #{tpu_custom_call.1} parent=5 // pred_check_branch
        %200 = sbr.rel (%p198) target = $region32
      $region31: #{tpu_custom_call.1} parent=5 // pred_region
        // Predicated region
        $region33: #{tpu_custom_call.1} parent=31 // pred_check
          %p201 = pneg %p36
        $region34: #{tpu_custom_call.1} parent=31 // pred_check_branch
          %203 = sbr.rel (%p201) target = $region36
        $region35: #{tpu_custom_call.1} parent=31 // pred_region
          %p204 = scmp.lt.s32.totalorder %s16, 1
          %s205 = scalar_select %p204, %s16, 1
          %s206 = smul.addr %s205, 4
          %s207 = scalar_lea.vmem %s0, %s206
        $region36: #{tpu_custom_call.1} parent=31 // pred_fallthru
          _
      $region32: #{tpu_custom_call.1} parent=5 // pred_fallthru
        _
      %p208 = scmp.le.s32.totalorder 1, %s16
      %p209 = scmp.lt.s32.totalorder %s16, 3
      %p210 = pnand %p208, %p209
      %p211 = pneg %p210
      // Predicated region
      $region37: #{tpu_custom_call.1} parent=5 // pred_check
        _
      $region38: #{tpu_custom_call.1} parent=5 // pred_check_branch
        %213 = sbr.rel (%p210) target = $region40
      $region39: #{tpu_custom_call.1} parent=5 // pred_region
        %s214 = ssub.s32 %s16, 1
        // Predicated region
        $region41: #{tpu_custom_call.1} parent=39 // pred_check
          %p215 = pneg %p63
        $region42: #{tpu_custom_call.1} parent=39 // pred_check_branch
          %217 = sbr.rel (%p215) target = $region44
        $region43: #{tpu_custom_call.1} parent=39 // pred_region
          %219 = dma.done [#allocation3], 32
        $region44: #{tpu_custom_call.1} parent=39 // pred_fallthru
          _
        // Predicated region
        $region45: #{tpu_custom_call.1} parent=39 // pred_check
          %p220 = pneg %p84
        $region46: #{tpu_custom_call.1} parent=39 // pred_check_branch
          %222 = sbr.rel (%p220) target = $region48
        $region47: #{tpu_custom_call.1} parent=39 // pred_region
          %224 = dma.done [#allocation6], 32
        $region48: #{tpu_custom_call.1} parent=39 // pred_fallthru
          _
        %p225 = scmp.lt.s32.totalorder %s21, 1
        %s226 = scalar_select %p225, %s21, 1
        %s227 = smul.addr %s226, 4
        %s228 = scalar_lea.vmem %s0, %s227
        %p229 = pneg %p42
        %p230 = pneg %p39
        %p231 = pneg %p63
        %p232 = pneg %p60
        %p233 = pneg %p84
        %p234 = pneg %p81
        %p235 = pneg %p105
        %p236 = pneg %p102
        %p237 = pneg %p126
        %p238 = pneg %p123
        %p239 = pneg %p152
        %p240 = pneg %p149
        %s241 = sand.u32 %s139, 1
        %s242 = scalar_lea.sflag [#allocation4], %s241
        %s243 = sand.u32 %s139, 1
        %s244 = smul.addr %s243, 4
        %s245 = scalar_lea.vmem [#allocation7], %s244
        %p246 = scmp.lt.s32.totalorder %s21, 1
        %s247 = scalar_select %p246, %s21, 1
        %s248 = smul.addr %s247, 4
        %s249 = scalar_lea.vmem %s0, %s248
        %v251 = vld [vmem:[#allocation2] sm:$0x3]
        %v252 = vld [vmem:[#allocation5] sm:$0x3]
        %v253 = vld [vmem:[%s3] sm:$0xf]
        %v254 = vld [vmem:[%s4] sm:$0xf]
        %v255 = vld [vmem:[%s249] sm:$0xf]
        %v256 = vpack.c.bf16 %v255, %v255
        %v258 = vunpack.c.l.b16 %v256
        %v259 = vpack.c.b16 %v258, %v258
        %260 = vrot.lane.b32.xlu0 %v259, 1
        %v261 = vpop.permute.xlu0 %260
        %vm262 = vcmask 7168
        %v265 = vsel %vm262, 0, %v261
        %266 = vrot.lane.b32.xlu0 %v259, 127
        %v267 = vpop.permute.xlu0 %266
        %vm268 = vcmask 121856
        %v270 = vsel %vm268, %v267, 0
        %v271 = vrot.slane %v259, 6
        %v273 = vrot.slane %v270, 4
        %vm274 = vcmask 1041408
        %v276 = vsel %vm274, %v265, %v271
        %vm277 = vcmask 1043456
        %v279 = vsel %vm277, %v276, %v273
        %281 = vset.pattern.permute.xlu0 0
        %282 = vperm.xlu0 %281, %v253
        %v283 = vpop.permute.xlu0 %282
        %vm285 = vcmask 97280
        %v287 = vsel %vm285, %v251, 0
        %vm289 = vcmask 1045504
        %v290 = vsel %vm289, %v279, 0
        %292 = vmatpush.bf16.msra.mxu0 0
        %293 = vmatpush.bf16.msra.mxu0 0
        %294 = vmatpush.bf16.msra.mxu0 0
        %295 = vmatpush.bf16.msra.mxu0 0
        %296 = vmatpush.bf16.msra.mxu0 0
        %297 = vmatpush.bf16.msra.mxu0 0
        %298 = vmatpush.bf16.msra.mxu0 0
        %299 = vmatpush.bf16.msra.mxu0 %v290
        %300 = vmatmul.bf16.gmra.mxu0 %v287
        %v301 = vpop.f32.mrf.mxu0
        %v302 = vadd.f32 %v283, %v301
        %v303 = vpop.f32.mrf.mxu0
        %304 = vdwg.mxu0
        %v305 = vmax.f32 %v302, 0.0
        %v306 = vpack.c.bf16 %v305, %v305
        %v308 = vunpack.c.l.b16 %v306
        %v309 = vpack.c.b16 %v308, %v308
        %310 = vrot.lane.b32.xlu0 %v309, 1
        %v311 = vpop.permute.xlu0 %310
        %v313 = vsel %vm262, 0, %v311
        %314 = vrot.lane.b32.xlu0 %v309, 127
        %v315 = vpop.permute.xlu0 %314
        %v317 = vsel %vm268, %v315, 0
        %v318 = vrot.slane %v309, 6
        %v320 = vrot.slane %v317, 4
        %v322 = vsel %vm274, %v313, %v318
        %v324 = vsel %vm277, %v322, %v320
        %326 = vset.pattern.permute.xlu0 0
        %327 = vperm.xlu0 %326, %v254
        %v328 = vpop.permute.xlu0 %327
        %v331 = vsel %vm285, %v252, 0
        %v333 = vsel %vm289, %v324, 0
        %335 = vmatpush.bf16.msra.mxu0 0
        %336 = vmatpush.bf16.msra.mxu0 0
        %337 = vmatpush.bf16.msra.mxu0 0
        %338 = vmatpush.bf16.msra.mxu0 0
        %339 = vmatpush.bf16.msra.mxu0 0
        %340 = vmatpush.bf16.msra.mxu0 0
        %341 = vmatpush.bf16.msra.mxu0 0
        %342 = vmatpush.bf16.msra.mxu0 %v333
        %343 = vmatmul.bf16.gmra.mxu0 %v331
        %v344 = vpop.f32.mrf.mxu0
        %v345 = vadd.f32 %v328, %v344
        %v346 = vpop.f32.mrf.mxu0
        %347 = vdwg.mxu0
        %v348 = vadd.f32 %v345, %v255
        %v349 = vmax.f32 %v348, 0.0
        %vm350 = vcmask 125952
        %351 = vst.msk [vmem:[%s245] sm:$0xf] %vm350, %v349
        %s352 = sand.u32 %s139, 1
        %s353 = scalar_lea.sflag [#allocation4], %s352
        %s354 = sand.u32 %s139, 1
        %s355 = smul.addr %s354, 4
        %s356 = scalar_lea.vmem [#allocation7], %s355
        // Predicated region
        $region49: #{tpu_custom_call.1} parent=39 // pred_check
          %p357 = pneg %p149
        $region50: #{tpu_custom_call.1} parent=39 // pred_check_branch
          %359 = sbr.rel (%p357) target = $region52
        $region51: #{tpu_custom_call.1} parent=39 // pred_region
          %361 = vsyncadd %s353, 0
          %s362 = smul.addr %s21, 4
          %s363 = scalar_lea.hbm %s5, %s362
          %s365 = sshll.u32 %s356, 4
          %s366 = int_to_ptr.vmem [resolvable:$true] %s365
          %s367 = sshll.u32 %s363, 4
          %s368 = int_to_ptr.hbm [resolvable:$true] %s367
          %370 = dma.vmem_to_hbm [thread:$0]  %s366, 64, %s368, %s353
        $region52: #{tpu_custom_call.1} parent=39 // pred_fallthru
          _
      $region40: #{tpu_custom_call.1} parent=5 // pred_fallthru
        _
      %p371 = scmp.le.s32.totalorder 2, %s16
      // Predicated region
      $region53: #{tpu_custom_call.1} parent=5 // pred_check
        %p372 = pneg %p371
      $region54: #{tpu_custom_call.1} parent=5 // pred_check_branch
        %374 = sbr.rel (%p372) target = $region56
      $region55: #{tpu_custom_call.1} parent=5 // pred_region
        %s375 = ssub.s32 %s16, 2
        // Predicated region
        $region57: #{tpu_custom_call.1} parent=55 // pred_check
          %p376 = pneg %p155
        $region58: #{tpu_custom_call.1} parent=55 // pred_check_branch
          %378 = sbr.rel (%p376) target = $region60
        $region59: #{tpu_custom_call.1} parent=55 // pred_region
          %s379 = sand.u32 %s140, 1
          %s380 = scalar_lea.sflag [#allocation4], %s379
          %s381 = sand.u32 %s140, 1
          %s382 = smul.addr %s381, 4
          %s383 = scalar_lea.vmem [#allocation7], %s382
          %385 = dma.done %s380, 64
        $region60: #{tpu_custom_call.1} parent=55 // pred_fallthru
          _
      $region56: #{tpu_custom_call.1} parent=5 // pred_fallthru
        _
    $region6: #{tpu_custom_call.1} parent=1 // loop_footer
      %s20 = sadd.s32 1, %s16
    $region7: #{tpu_custom_call.1} parent=1 // loop_footer_branch
      %15 = sbr.rel target = $region3
    $region8: #{tpu_custom_call.1} parent=1 // loop_exit
      _
    %386 = vsyncpa [#allocation3], 1
    %s387 = scalar_lea.sflag [#allocation3], 1
    %388 = vsyncpa %s387, 1
    %389 = vsyncpa [#allocation6], 1
    %390 = vsyncpa [#allocation4], 1
    %s391 = scalar_lea.sflag [#allocation4], 1
    %392 = vsyncpa %s391, 1

</llo_original>
